<compile_context>
chip_gen: v7x
topology: tpu7x:2x2x1
jax: 0.10.0
libtpu: 0.0.40
codegen_flags: <defaults>
</compile_context>

<pallas_src>
import numpy as np
import jax
import jax.numpy as jnp
from jax.experimental import pallas as pl
from jax.experimental.pallas import tpu as pltpu


def _make_cb_focal_kernel(gamma: float, n_rows_total: int, tile_rows: int):
    gamma = float(gamma)
    gamma_is_small_int = (gamma == int(gamma)) and (0.0 <= gamma <= 8.0)

    def kernel(logits_ref, labels_ref, alpha_t_ref, out_ref):
        # Upcast in-kernel: DMA bf16 (half the HBM bytes), compute in f32.
        logits = logits_ref[...].astype(jnp.float32)     # (TB, C)
        labels = labels_ref[...]                         # (TB, 1) int32
        alpha_t = alpha_t_ref[...]                       # (TB, 1) f32 (pre-gathered)
        TB, C = logits.shape

        # Numerically-stable log-sum-exp pieces (all reductions / exp in f32).
        m = jnp.max(logits, axis=-1, keepdims=True)       # (TB, 1)
        z = logits - m                                     # (TB, C)
        lse = jnp.log(jnp.sum(jnp.exp(z), axis=-1, keepdims=True))  # (TB, 1)

        # Fused one-hot "gather" of z at the label column via iota compare +
        # masked reduction — do NOT materialize logp = z - lse over (TB, C);
        # subtract lse on the (TB, 1) vector instead (bit-identical, one fewer
        # full-tile VPU pass and one fewer (TB, C) live temporary).
        col = jax.lax.broadcasted_iota(jnp.int32, (TB, C), 1)
        cls_mask = (col == labels)                                    # (TB, C) bool
        z_t = jnp.sum(jnp.where(cls_mask, z, 0.0),
                      axis=-1, keepdims=True)                         # (TB, 1)
        logpt = z_t - lse                                             # (TB, 1)

        if gamma == 0.0:
            focal = jnp.ones_like(logpt)
        else:
            pt = jnp.exp(logpt)                                       # (TB, 1) EUP
            # pt can exceed 1.0 by an ulp -> clamp so pow / multiplies stay clean.
            one_minus_pt = jnp.maximum(1.0 - pt, 0.0)
            if gamma_is_small_int:
                # Integer gamma: VPU multiplies instead of EUP exp(log()) power.
                focal = jnp.ones_like(one_minus_pt)
                for _ in range(int(gamma)):
                    focal = focal * one_minus_pt
            else:
                focal = jnp.power(one_minus_pt, jnp.float32(gamma))

        loss_i = -alpha_t * focal * logpt                             # (TB, 1)

        # Mask rows past the real batch size (last, possibly padded tile).
        # (jnp.where select does not propagate NaN/Inf from unselected rows.)
        row = jax.lax.broadcasted_iota(jnp.int32, (TB, 1), 0)
        valid = (pl.program_id(0) * tile_rows + row) < n_rows_total
        tile_sum = jnp.sum(jnp.where(valid, loss_i, 0.0))

        # Lane-dense (1, 8, 128) partial-sum block; host reads [:, 0, 0].
        out_ref[...] = jnp.full(out_ref.shape, tile_sum, jnp.float32)

    return kernel


def cb_loss_pallas(logits, labels, samples_per_cls, no_of_classes,
                   beta, gamma=0.0, block_rows=None,
                   vmem_budget_bytes=12 * 1024 * 1024):
    """Class-balanced focal loss. logits: [B, C] (f32 or bf16), labels: [B] int."""
    # --- glue: class-balanced weights (same math as the PyTorch __init__) ---
    spc = np.asarray(samples_per_cls, dtype=np.float64)
    effective_num = 1.0 - np.power(beta, spc)
    weights = (1.0 - beta) / effective_num
    weights = weights / np.sum(weights) * no_of_classes
    alpha = jnp.asarray(weights, dtype=jnp.float32)               # (C,)

    B, C = logits.shape
    labels_i32 = labels.astype(jnp.int32)
    labels2d = labels_i32.reshape(B, 1)
    # Pre-gather the per-sample alpha on the host/XLA side (O(B) take): the
    # kernel then only needs one masked cross-lane reduce (for z_t), not two.
    alpha_t = jnp.take(alpha, labels_i32, axis=0).reshape(B, 1)   # (B, 1) f32

    # --- byte-targeted batch tile sizing ------------------------------------
    # Per-row double-buffered VMEM cost:
    #   2 * (lane-padded logits row)                       = 2 * ceil(C,128)*isz
    #   2 * (labels  (tb,1) int32 block pads to 128 lanes) = 2 * 512 B
    #   2 * (alpha_t (tb,1) f32   block pads to 128 lanes) = 2 * 512 B
    # Budget ~12 MiB of input buffers -> ~2-6 MiB logits blocks, fits v5e's
    # 16 MiB default scoped VMEM and stays well under v7x's 64 MiB per-TC
    # physical even with both TCs holding their own double buffers.
    itemsize = jnp.dtype(logits.dtype).itemsize
    c_pad = ((C + 127) // 128) * 128
    bytes_per_row = 2 * c_pad * itemsize + 2 * 512 + 2 * 512
    if block_rows is None:
        block_rows = max(8, vmem_budget_bytes // bytes_per_row)
    b_pad = ((B + 7) // 8) * 8
    tb = max(8, (int(min(int(block_rows), b_pad)) // 8) * 8)   # sublane multiple
    num_tiles = (B + tb - 1) // tb

    kernel = _make_cb_focal_kernel(float(gamma), B, tb)

    partials = pl.pallas_call(
        kernel,
        out_shape=jax.ShapeDtypeStruct((num_tiles, 8, 128), jnp.float32),
        grid=(num_tiles,),
        in_specs=[
            pl.BlockSpec((tb, C), lambda i: (i, 0)),   # logits tile
            pl.BlockSpec((tb, 1), lambda i: (i, 0)),   # labels tile
            pl.BlockSpec((tb, 1), lambda i: (i, 0)),   # per-sample alpha tile
        ],
        out_specs=pl.BlockSpec((1, 8, 128), lambda i: (i, 0, 0)),
        compiler_params=pltpu.CompilerParams(
            dimension_semantics=("parallel",),
            # Explicit scoped-VMEM limit: covers v5e's 16 MiB default while the
            # tile budget above already respects v7x's per-TC ceiling.
            vmem_limit_bytes=32 * 1024 * 1024,
        ),
    )(logits, labels2d, alpha_t)

    return jnp.sum(partials[:, 0, 0]) / jnp.float32(B)


if __name__ == "__main__":
    # Small but lane-dense demo shapes (C = 128 -> full lane utilization);
    # B = 100 exercises the padded (non-multiple-of-8) last tile masking.
    B, C = 100, 128
    beta = 0.9999
    gamma = 2.0
    samples_per_cls = [int(10 + 7 * i) for i in range(C)]  # deterministic counts

    key = jax.random.PRNGKey(0)
    k1, k2 = jax.random.split(key)
    logits_f32 = jax.random.normal(k1, (B, C), dtype=jnp.float32)
    labels = jax.random.randint(k2, (B,), 0, C, dtype=jnp.int32)

    # Feed bf16 logits (halves HBM traffic); kernel upcasts to f32 internally.
    logits_bf16 = logits_f32.astype(jnp.bfloat16)

    # Reference in plain JAX (same bf16->f32 upcast as the kernel sees).
    spc = np.asarray(samples_per_cls, dtype=np.float64)
    w = (1.0 - beta) / (1.0 - np.power(beta, spc))
    w = w / w.sum() * C
    logits_ref = logits_bf16.astype(jnp.float32)
    logp = jax.nn.log_softmax(logits_ref, axis=-1)
    logpt = jnp.take_along_axis(logp, labels[:, None], axis=-1)[:, 0]
    pt = jnp.exp(logpt)
    alpha_t_ref = jnp.asarray(w, jnp.float32)[labels]
    ref = jnp.mean(-alpha_t_ref * jnp.maximum(1.0 - pt, 0.0) ** gamma * logpt)

    # 1) Auto (byte-budgeted) tile sizing: single padded tile at this size.
    loss = cb_loss_pallas(logits_bf16, labels, samples_per_cls, C, beta, gamma)
    jax.block_until_ready(loss)
    assert np.allclose(np.asarray(loss), np.asarray(ref), rtol=1e-4, atol=1e-5), (
        f"mismatch (auto tiles): {loss} vs {ref}")

    # 2) Forced small tiles: exercises the multi-tile grid + last-tile masking.
    loss_tiled = cb_loss_pallas(logits_bf16, labels, samples_per_cls, C, beta,
                                gamma, block_rows=32)
    jax.block_until_ready(loss_tiled)
    assert np.allclose(np.asarray(loss_tiled), np.asarray(ref),
                       rtol=1e-4, atol=1e-5), (
        f"mismatch (tiled): {loss_tiled} vs {ref}")

    print("KERNEL_OK")
</pallas_src>

<mosaic_0001>
module attributes {stable_mosaic.version = 11 : i64} {
  func.func @kernel(%arg0: i32, %arg1: memref<104x128xbf16, #tpu.memory_space<vmem>>, %arg2: memref<104x1xi32, #tpu.memory_space<vmem>>, %arg3: memref<104x1xf32, #tpu.memory_space<vmem>>, %arg4: memref<1x8x128xf32, #tpu.memory_space<vmem>>) attributes {dimension_semantics = [#tpu.dimension_semantics<parallel>], iteration_bounds = array<i64: 1>, scalar_prefetch = 0 : i64, scratch_operands = 0 : i64, tpu.core_type = #tpu.core_type<tc>, window_params = [{transform_indices = @transform_0, window_bounds = array<i64: 104, 128>}, {transform_indices = @transform_1, window_bounds = array<i64: 104, 1>}, {transform_indices = @transform_2, window_bounds = array<i64: 104, 1>}, {transform_indices = @transform_3, window_bounds = array<i64: 1, 8, 128>}]} {
    %c0 = arith.constant 0 : index
    %c0_0 = arith.constant 0 : index
    %0 = vector.load %arg1[%c0, %c0_0] : memref<104x128xbf16, #tpu.memory_space<vmem>>, vector<104x128xbf16>
    %1 = arith.extf %0 : vector<104x128xbf16> to vector<104x128xf32>
    %c0_1 = arith.constant 0 : index
    %c0_2 = arith.constant 0 : index
    %2 = vector.load %arg2[%c0_1, %c0_2] : memref<104x1xi32, #tpu.memory_space<vmem>>, vector<104x1xi32>
    %c0_3 = arith.constant 0 : index
    %c0_4 = arith.constant 0 : index
    %3 = vector.load %arg3[%c0_3, %c0_4] : memref<104x1xf32, #tpu.memory_space<vmem>>, vector<104x1xf32>
    %cst = arith.constant dense<0xFF800000> : vector<104xf32>
    %4 = vector.multi_reduction <maximumf>, %1, %cst [1] : vector<104x128xf32> to vector<104xf32>
    %5 = vector.shape_cast %4 : vector<104xf32> to vector<104x1xf32>
    %6 = vector.broadcast %5 : vector<104x1xf32> to vector<104x128xf32>
    %7 = arith.subf %1, %6 : vector<104x128xf32>
    %8 = math.exp %7 : vector<104x128xf32>
    %cst_5 = arith.constant dense<0.000000e+00> : vector<104xf32>
    %9 = vector.multi_reduction <add>, %8, %cst_5 [1] : vector<104x128xf32> to vector<104xf32>
    %10 = vector.shape_cast %9 : vector<104xf32> to vector<104x1xf32>
    %11 = math.log %10 : vector<104x1xf32>
    %12 = tpu.iota {dimensions = array<i32: 1>} : vector<104x128xi32>
    %13 = vector.broadcast %2 : vector<104x1xi32> to vector<104x128xi32>
    %14 = arith.cmpi eq, %12, %13 : vector<104x128xi32>
    %cst_6 = arith.constant 0.000000e+00 : f32
    %15 = vector.broadcast %cst_6 : f32 to vector<104x128xf32>
    %16 = arith.select %14, %7, %15 : vector<104x128xi1>, vector<104x128xf32>
    %cst_7 = arith.constant dense<0.000000e+00> : vector<104xf32>
    %17 = vector.multi_reduction <add>, %16, %cst_7 [1] : vector<104x128xf32> to vector<104xf32>
    %18 = vector.shape_cast %17 : vector<104xf32> to vector<104x1xf32>
    %19 = arith.subf %18, %11 : vector<104x1xf32>
    %20 = math.exp %19 : vector<104x1xf32>
    %cst_8 = arith.constant 1.000000e+00 : f32
    %21 = vector.broadcast %cst_8 : f32 to vector<104x1xf32>
    %22 = arith.subf %21, %20 : vector<104x1xf32>
    %cst_9 = arith.constant 0.000000e+00 : f32
    %23 = vector.broadcast %cst_9 : f32 to vector<104x1xf32>
    %24 = arith.maximumf %22, %23 : vector<104x1xf32>
    %cst_10 = arith.constant 1.000000e+00 : f32
    %25 = vector.broadcast %cst_10 : f32 to vector<104x1xf32>
    %26 = arith.mulf %25, %24 : vector<104x1xf32>
    %27 = arith.mulf %26, %24 : vector<104x1xf32>
    %cst_11 = arith.constant 0.000000e+00 : f32
    %28 = vector.broadcast %cst_11 : f32 to vector<104x1xf32>
    %29 = arith.subf %28, %3 : vector<104x1xf32>
    %30 = arith.mulf %29, %27 : vector<104x1xf32>
    %31 = arith.mulf %30, %19 : vector<104x1xf32>
    %32 = tpu.iota {dimensions = array<i32: 0>} : vector<104x1xi32>
    %c104_i32 = arith.constant 104 : i32
    %33 = arith.muli %arg0, %c104_i32 : i32
    %34 = vector.broadcast %33 : i32 to vector<104x1xi32>
    %35 = arith.addi %34, %32 : vector<104x1xi32>
    %c100_i32 = arith.constant 100 : i32
    %36 = vector.broadcast %c100_i32 : i32 to vector<104x1xi32>
    %37 = arith.cmpi slt, %35, %36 : vector<104x1xi32>
    %cst_12 = arith.constant 0.000000e+00 : f32
    %38 = vector.broadcast %cst_12 : f32 to vector<104x1xf32>
    %39 = arith.select %37, %31, %38 : vector<104x1xi1>, vector<104x1xf32>
    %40 = vector.shape_cast %39 : vector<104x1xf32> to vector<1x104x1xf32>
    %cst_13 = arith.constant dense<0.000000e+00> : vector<1xf32>
    %41 = vector.multi_reduction <add>, %40, %cst_13 [1, 2] : vector<1x104x1xf32> to vector<1xf32>
    %42 = vector.shape_cast %41 : vector<1xf32> to vector<1x1x1xf32>
    %43 = vector.extract %42[0, 0, 0] : f32 from vector<1x1x1xf32>
    %44 = vector.broadcast %43 : f32 to vector<1x8x128xf32>
    %c0_14 = arith.constant 0 : index
    %c0_15 = arith.constant 0 : index
    %c0_16 = arith.constant 0 : index
    %45 = vector.load %arg4[%c0_14, %c0_15, %c0_16] : memref<1x8x128xf32, #tpu.memory_space<vmem>>, vector<1x8x128xf32>
    tpu.vector_store %arg4[%c0_14, %c0_15, %c0_16], %44 {strides = array<i32>} : memref<1x8x128xf32, #tpu.memory_space<vmem>>, vector<1x8x128xf32>,
    return
  }
  func.func @transform_0(%arg0: i32) -> (i32, i32) {
    %c0_i32 = arith.constant 0 : i32
    %c0_i32_0 = arith.constant 0 : i32
    return %arg0, %c0_i32 : i32, i32
  }
  func.func @transform_1(%arg0: i32) -> (i32, i32) {
    %c0_i32 = arith.constant 0 : i32
    %c0_i32_0 = arith.constant 0 : i32
    return %arg0, %c0_i32 : i32, i32
  }
  func.func @transform_2(%arg0: i32) -> (i32, i32) {
    %c0_i32 = arith.constant 0 : i32
    %c0_i32_0 = arith.constant 0 : i32
    return %arg0, %c0_i32 : i32, i32
  }
  func.func @transform_3(%arg0: i32) -> (i32, i32, i32) {
    %c0_i32 = arith.constant 0 : i32
    %c0_i32_0 = arith.constant 0 : i32
    %c0_i32_1 = arith.constant 0 : i32
    return %arg0, %c0_i32, %c0_i32_0 : i32, i32, i32
  }
}

</mosaic_0001>

<llo_original>
// kernel: tpu_custom_call.1
$region0: #{tpu_custom_call.1}
  #allocation0 [shape = 'u32[]', space=smem, size = 0x4, offset = 0x4, fixed_abs, tag = 'smem constant byte address 0x4 - core index']
  #allocation1 [shape = 'u32[144,128]{1,0:T(1,128)}', space=vmem, size = 0x12000, scoped, tag = 'internal scratch']
  %s0 = inlined_call_operand.vmem [shape: bf16[100,128], index: 0, kind: input, shape index: {}]
  %s1 = inlined_call_operand.vmem [shape: s32[100,1], index: 1, kind: input, shape index: {}]
  %s2 = inlined_call_operand.vmem [shape: f32[100,1], index: 2, kind: input, shape index: {}]
  %s3 = inlined_call_operand.hbm [shape: f32[1,8,128], index: 3, kind: output, shape index: {}]
  %s4 = sld [smem:[#allocation0]]
  $region22: #{tpu_custom_call.1} parent=0
    _
  %s6 = ssub.s32 1, %s4
  %s7 = scalar_select 0, %s6, %s4
  $region1: #{tpu_custom_call.1} parent=0
    #allocation2 [shape = 'u8[4096]{0}', space=vmem, size = 0x1000, scoped, tag = 'output window, operand 0, single buffered']
    #allocation3 [shape = 's32[1]{0}', space=sflag, size = 0x4, scoped, tag = 'scoped memory for tpu_custom_call.1']
    %8 = vsyncpa [#allocation3], 0
    // Predicated region
    $region2: #{tpu_custom_call.1} parent=1 // pred_check
      _
    $region3: #{tpu_custom_call.1} parent=1 // pred_check_branch
      %10 = sbr.rel (0) target = $region5
    $region4: #{tpu_custom_call.1} parent=1 // pred_region
      _
    $region5: #{tpu_custom_call.1} parent=1 // pred_fallthru
      _
    // Predicated region
    $region6: #{tpu_custom_call.1} parent=1 // pred_check
      _
    $region7: #{tpu_custom_call.1} parent=1 // pred_check_branch
      %12 = sbr.rel (0) target = $region9
    $region8: #{tpu_custom_call.1} parent=1 // pred_region
      _
    $region9: #{tpu_custom_call.1} parent=1 // pred_fallthru
      _
    // Predicated region
    $region10: #{tpu_custom_call.1} parent=1 // pred_check
      _
    $region11: #{tpu_custom_call.1} parent=1 // pred_check_branch
      %14 = sbr.rel (0) target = $region13
    $region12: #{tpu_custom_call.1} parent=1 // pred_region
      _
    $region13: #{tpu_custom_call.1} parent=1 // pred_fallthru
      _
    %v15 = vld [vmem:[%s0] sm:$0xf]
    %v16 = vld [vmem:[%s0 + $0x4] sm:$0xf]
    %v17 = vld [vmem:[%s0 + $0x8] sm:$0xf]
    %v18 = vld [vmem:[%s0 + $0xc] sm:$0xf]
    %v19 = vld [vmem:[%s0 + $0x10] sm:$0xf]
    %v20 = vld [vmem:[%s0 + $0x14] sm:$0xf]
    %v21 = vld [vmem:[%s0 + $0x18] sm:$0xf]
    %v22 = vld [vmem:[%s0 + $0x1c] sm:$0xf]
    %v23 = vld [vmem:[%s0 + $0x20] sm:$0xf]
    %v24 = vld [vmem:[%s0 + $0x24] sm:$0xf]
    %v25 = vld [vmem:[%s0 + $0x28] sm:$0xf]
    %v26 = vld [vmem:[%s0 + $0x2c] sm:$0xf]
    %v27 = vld [vmem:[%s0 + $0x30] sm:$0xf]
    %v28 = vunpack.c.l.bf16 %v15
    %v29 = vunpack.c.l.bf16 %v16
    %v30 = vunpack.c.l.bf16 %v17
    %v31 = vunpack.c.l.bf16 %v18
    %v32 = vunpack.c.l.bf16 %v19
    %v33 = vunpack.c.l.bf16 %v20
    %v34 = vunpack.c.l.bf16 %v21
    %v35 = vunpack.c.l.bf16 %v22
    %v36 = vunpack.c.l.bf16 %v23
    %v37 = vunpack.c.l.bf16 %v24
    %v38 = vunpack.c.l.bf16 %v25
    %v39 = vunpack.c.l.bf16 %v26
    %v40 = vunpack.c.l.bf16 %v27
    %v41 = vld [vmem:[%s1] sm:$0xff]
    %v42 = vld [vmem:[%s1 + $0x8] sm:$0xff]
    %v43 = vld [vmem:[%s1 + $0x10] sm:$0xff]
    %v44 = vld [vmem:[%s1 + $0x18] sm:$0xff]
    %v45 = vld [vmem:[%s1 + $0x20] sm:$0xff]
    %v46 = vld [vmem:[%s1 + $0x28] sm:$0xff]
    %v47 = vld [vmem:[%s1 + $0x30] sm:$0xff]
    %v48 = vld [vmem:[%s1 + $0x38] sm:$0xff]
    %v49 = vld [vmem:[%s1 + $0x40] sm:$0xff]
    %v50 = vld [vmem:[%s1 + $0x48] sm:$0xff]
    %v51 = vld [vmem:[%s1 + $0x50] sm:$0xff]
    %v52 = vld [vmem:[%s1 + $0x58] sm:$0xff]
    %v53 = vld [vmem:[%s1 + $0x60] sm:$0xff]
    %v54 = vld [vmem:[%s2] sm:$0xff]
    %v55 = vld [vmem:[%s2 + $0x8] sm:$0xff]
    %v56 = vld [vmem:[%s2 + $0x10] sm:$0xff]
    %v57 = vld [vmem:[%s2 + $0x18] sm:$0xff]
    %v58 = vld [vmem:[%s2 + $0x20] sm:$0xff]
    %v59 = vld [vmem:[%s2 + $0x28] sm:$0xff]
    %v60 = vld [vmem:[%s2 + $0x30] sm:$0xff]
    %v61 = vld [vmem:[%s2 + $0x38] sm:$0xff]
    %v62 = vld [vmem:[%s2 + $0x40] sm:$0xff]
    %v63 = vld [vmem:[%s2 + $0x48] sm:$0xff]
    %v64 = vld [vmem:[%s2 + $0x50] sm:$0xff]
    %v65 = vld [vmem:[%s2 + $0x58] sm:$0xff]
    %v66 = vld [vmem:[%s2 + $0x60] sm:$0xff]
    %67 = vmax.xlane.f32.xlu0 %v28
    %v68 = vpop.xlane.xlu0 %67
    %69 = vmax.xlane.f32.xlu0 %v29
    %v70 = vpop.xlane.xlu0 %69
    %71 = vmax.xlane.f32.xlu0 %v30
    %v72 = vpop.xlane.xlu0 %71
    %73 = vmax.xlane.f32.xlu0 %v31
    %v74 = vpop.xlane.xlu0 %73
    %75 = vmax.xlane.f32.xlu0 %v32
    %v76 = vpop.xlane.xlu0 %75
    %77 = vmax.xlane.f32.xlu0 %v33
    %v78 = vpop.xlane.xlu0 %77
    %79 = vmax.xlane.f32.xlu0 %v34
    %v80 = vpop.xlane.xlu0 %79
    %81 = vmax.xlane.f32.xlu0 %v35
    %v82 = vpop.xlane.xlu0 %81
    %83 = vmax.xlane.f32.xlu0 %v36
    %v84 = vpop.xlane.xlu0 %83
    %85 = vmax.xlane.f32.xlu0 %v37
    %v86 = vpop.xlane.xlu0 %85
    %87 = vmax.xlane.f32.xlu0 %v38
    %v88 = vpop.xlane.xlu0 %87
    %89 = vmax.xlane.f32.xlu0 %v39
    %v90 = vpop.xlane.xlu0 %89
    %91 = vmax.xlane.f32.xlu0 %v40
    %v92 = vpop.xlane.xlu0 %91
    %v93 = vsub.f32 %v28, %v68
    %v94 = vsub.f32 %v29, %v70
    %v95 = vsub.f32 %v30, %v72
    %v96 = vsub.f32 %v31, %v74
    %v97 = vsub.f32 %v32, %v76
    %v98 = vsub.f32 %v33, %v78
    %v99 = vsub.f32 %v34, %v80
    %v100 = vsub.f32 %v35, %v82
    %v101 = vsub.f32 %v36, %v84
    %v102 = vsub.f32 %v37, %v86
    %v103 = vsub.f32 %v38, %v88
    %v104 = vsub.f32 %v39, %v90
    %v105 = vsub.f32 %v40, %v92
    %v106 = vmul.f32 %v93, 1.442695
    %v107 = vpow.pop %v106
    %v108 = vmul.f32 %v94, 1.442695
    %v109 = vpow.pop %v108
    %v110 = vmul.f32 %v95, 1.442695
    %v111 = vpow.pop %v110
    %v112 = vmul.f32 %v96, 1.442695
    %v113 = vpow.pop %v112
    %v114 = vmul.f32 %v97, 1.442695
    %v115 = vpow.pop %v114
    %v116 = vmul.f32 %v98, 1.442695
    %v117 = vpow.pop %v116
    %v118 = vmul.f32 %v99, 1.442695
    %v119 = vpow.pop %v118
    %v120 = vmul.f32 %v100, 1.442695
    %v121 = vpow.pop %v120
    %v122 = vmul.f32 %v101, 1.442695
    %v123 = vpow.pop %v122
    %v124 = vmul.f32 %v102, 1.442695
    %v125 = vpow.pop %v124
    %v126 = vmul.f32 %v103, 1.442695
    %v127 = vpow.pop %v126
    %v128 = vmul.f32 %v104, 1.442695
    %v129 = vpow.pop %v128
    %v130 = vmul.f32 %v105, 1.442695
    %v131 = vpow.pop %v130
    %132 = vadd.xlane.f32.xlu0 %v107
    %v133 = vpop.xlane.xlu0 %132
    %134 = vadd.xlane.f32.xlu0 %v109
    %v135 = vpop.xlane.xlu0 %134
    %136 = vadd.xlane.f32.xlu0 %v111
    %v137 = vpop.xlane.xlu0 %136
    %138 = vadd.xlane.f32.xlu0 %v113
    %v139 = vpop.xlane.xlu0 %138
    %140 = vadd.xlane.f32.xlu0 %v115
    %v141 = vpop.xlane.xlu0 %140
    %142 = vadd.xlane.f32.xlu0 %v117
    %v143 = vpop.xlane.xlu0 %142
    %144 = vadd.xlane.f32.xlu0 %v119
    %v145 = vpop.xlane.xlu0 %144
    %146 = vadd.xlane.f32.xlu0 %v121
    %v147 = vpop.xlane.xlu0 %146
    %148 = vadd.xlane.f32.xlu0 %v123
    %v149 = vpop.xlane.xlu0 %148
    %150 = vadd.xlane.f32.xlu0 %v125
    %v151 = vpop.xlane.xlu0 %150
    %152 = vadd.xlane.f32.xlu0 %v127
    %v153 = vpop.xlane.xlu0 %152
    %154 = vadd.xlane.f32.xlu0 %v129
    %v155 = vpop.xlane.xlu0 %154
    %156 = vadd.xlane.f32.xlu0 %v131
    %v157 = vpop.xlane.xlu0 %156
    %v158 = vlog2.pop %v133
    %v159 = vmul.f32 %v158, 0.6931472
    %v160 = vlog2.pop %v135
    %v161 = vmul.f32 %v160, 0.6931472
    %v162 = vlog2.pop %v137
    %v163 = vmul.f32 %v162, 0.6931472
    %v164 = vlog2.pop %v139
    %v165 = vmul.f32 %v164, 0.6931472
    %v166 = vlog2.pop %v141
    %v167 = vmul.f32 %v166, 0.6931472
    %v168 = vlog2.pop %v143
    %v169 = vmul.f32 %v168, 0.6931472
    %v170 = vlog2.pop %v145
    %v171 = vmul.f32 %v170, 0.6931472
    %v172 = vlog2.pop %v147
    %v173 = vmul.f32 %v172, 0.6931472
    %v174 = vlog2.pop %v149
    %v175 = vmul.f32 %v174, 0.6931472
    %v176 = vlog2.pop %v151
    %v177 = vmul.f32 %v176, 0.6931472
    %v178 = vlog2.pop %v153
    %v179 = vmul.f32 %v178, 0.6931472
    %v180 = vlog2.pop %v155
    %v181 = vmul.f32 %v180, 0.6931472
    %v182 = vlog2.pop %v157
    %v183 = vmul.f32 %v182, 0.6931472
    %v184 = vlaneseq
    %v185 = vand.u32 %v184, 127
    %186 = vset.pattern.permute.xlu0 0
    %187 = vperm.xlu0 %186, %v41
    %v188 = vpop.permute.xlu0 %187
    %189 = vset.pattern.permute.xlu0 0
    %190 = vperm.xlu0 %189, %v42
    %v191 = vpop.permute.xlu0 %190
    %192 = vset.pattern.permute.xlu0 0
    %193 = vperm.xlu0 %192, %v43
    %v194 = vpop.permute.xlu0 %193
    %195 = vset.pattern.permute.xlu0 0
    %196 = vperm.xlu0 %195, %v44
    %v197 = vpop.permute.xlu0 %196
    %198 = vset.pattern.permute.xlu0 0
    %199 = vperm.xlu0 %198, %v45
    %v200 = vpop.permute.xlu0 %199
    %201 = vset.pattern.permute.xlu0 0
    %202 = vperm.xlu0 %201, %v46
    %v203 = vpop.permute.xlu0 %202
    %204 = vset.pattern.permute.xlu0 0
    %205 = vperm.xlu0 %204, %v47
    %v206 = vpop.permute.xlu0 %205
    %207 = vset.pattern.permute.xlu0 0
    %208 = vperm.xlu0 %207, %v48
    %v209 = vpop.permute.xlu0 %208
    %210 = vset.pattern.permute.xlu0 0
    %211 = vperm.xlu0 %210, %v49
    %v212 = vpop.permute.xlu0 %211
    %213 = vset.pattern.permute.xlu0 0
    %214 = vperm.xlu0 %213, %v50
    %v215 = vpop.permute.xlu0 %214
    %216 = vset.pattern.permute.xlu0 0
    %217 = vperm.xlu0 %216, %v51
    %v218 = vpop.permute.xlu0 %217
    %219 = vset.pattern.permute.xlu0 0
    %220 = vperm.xlu0 %219, %v52
    %v221 = vpop.permute.xlu0 %220
    %222 = vset.pattern.permute.xlu0 0
    %223 = vperm.xlu0 %222, %v53
    %v224 = vpop.permute.xlu0 %223
    %vm225 = vcmp.eq.s32.totalorder %v185, %v188
    %vm226 = vcmp.eq.s32.totalorder %v185, %v191
    %vm227 = vcmp.eq.s32.totalorder %v185, %v194
    %vm228 = vcmp.eq.s32.totalorder %v185, %v197
    %vm229 = vcmp.eq.s32.totalorder %v185, %v200
    %vm230 = vcmp.eq.s32.totalorder %v185, %v203
    %vm231 = vcmp.eq.s32.totalorder %v185, %v206
    %vm232 = vcmp.eq.s32.totalorder %v185, %v209
    %vm233 = vcmp.eq.s32.totalorder %v185, %v212
    %vm234 = vcmp.eq.s32.totalorder %v185, %v215
    %vm235 = vcmp.eq.s32.totalorder %v185, %v218
    %vm236 = vcmp.eq.s32.totalorder %v185, %v221
    %vm237 = vcmp.eq.s32.totalorder %v185, %v224
    %v238 = vsel %vm225, %v93, 0.0
    %v239 = vsel %vm226, %v94, 0.0
    %v240 = vsel %vm227, %v95, 0.0
    %v241 = vsel %vm228, %v96, 0.0
    %v242 = vsel %vm229, %v97, 0.0
    %v243 = vsel %vm230, %v98, 0.0
    %v244 = vsel %vm231, %v99, 0.0
    %v245 = vsel %vm232, %v100, 0.0
    %v246 = vsel %vm233, %v101, 0.0
    %v247 = vsel %vm234, %v102, 0.0
    %v248 = vsel %vm235, %v103, 0.0
    %v249 = vsel %vm236, %v104, 0.0
    %v250 = vsel %vm237, %v105, 0.0
    %251 = vadd.xlane.f32.xlu0 %v238
    %v252 = vpop.xlane.xlu0 %251
    %253 = vadd.xlane.f32.xlu0 %v239
    %v254 = vpop.xlane.xlu0 %253
    %255 = vadd.xlane.f32.xlu0 %v240
    %v256 = vpop.xlane.xlu0 %255
    %257 = vadd.xlane.f32.xlu0 %v241
    %v258 = vpop.xlane.xlu0 %257
    %259 = vadd.xlane.f32.xlu0 %v242
    %v260 = vpop.xlane.xlu0 %259
    %261 = vadd.xlane.f32.xlu0 %v243
    %v262 = vpop.xlane.xlu0 %261
    %263 = vadd.xlane.f32.xlu0 %v244
    %v264 = vpop.xlane.xlu0 %263
    %265 = vadd.xlane.f32.xlu0 %v245
    %v266 = vpop.xlane.xlu0 %265
    %267 = vadd.xlane.f32.xlu0 %v246
    %v268 = vpop.xlane.xlu0 %267
    %269 = vadd.xlane.f32.xlu0 %v247
    %v270 = vpop.xlane.xlu0 %269
    %271 = vadd.xlane.f32.xlu0 %v248
    %v272 = vpop.xlane.xlu0 %271
    %273 = vadd.xlane.f32.xlu0 %v249
    %v274 = vpop.xlane.xlu0 %273
    %275 = vadd.xlane.f32.xlu0 %v250
    %v276 = vpop.xlane.xlu0 %275
    %v277 = vsub.f32 %v252, %v159
    %v278 = vsub.f32 %v254, %v161
    %v279 = vsub.f32 %v256, %v163
    %v280 = vsub.f32 %v258, %v165
    %v281 = vsub.f32 %v260, %v167
    %v282 = vsub.f32 %v262, %v169
    %v283 = vsub.f32 %v264, %v171
    %v284 = vsub.f32 %v266, %v173
    %v285 = vsub.f32 %v268, %v175
    %v286 = vsub.f32 %v270, %v177
    %v287 = vsub.f32 %v272, %v179
    %v288 = vsub.f32 %v274, %v181
    %v289 = vsub.f32 %v276, %v183
    %v290 = vmul.f32 %v277, 1.442695
    %v291 = vpow.pop %v290
    %v292 = vmul.f32 %v278, 1.442695
    %v293 = vpow.pop %v292
    %v294 = vmul.f32 %v279, 1.442695
    %v295 = vpow.pop %v294
    %v296 = vmul.f32 %v280, 1.442695
    %v297 = vpow.pop %v296
    %v298 = vmul.f32 %v281, 1.442695
    %v299 = vpow.pop %v298
    %v300 = vmul.f32 %v282, 1.442695
    %v301 = vpow.pop %v300
    %v302 = vmul.f32 %v283, 1.442695
    %v303 = vpow.pop %v302
    %v304 = vmul.f32 %v284, 1.442695
    %v305 = vpow.pop %v304
    %v306 = vmul.f32 %v285, 1.442695
    %v307 = vpow.pop %v306
    %v308 = vmul.f32 %v286, 1.442695
    %v309 = vpow.pop %v308
    %v310 = vmul.f32 %v287, 1.442695
    %v311 = vpow.pop %v310
    %v312 = vmul.f32 %v288, 1.442695
    %v313 = vpow.pop %v312
    %v314 = vmul.f32 %v289, 1.442695
    %v315 = vpow.pop %v314
    %v316 = vsub.f32 1.0, %v291
    %v317 = vsub.f32 1.0, %v293
    %v318 = vsub.f32 1.0, %v295
    %v319 = vsub.f32 1.0, %v297
    %v320 = vsub.f32 1.0, %v299
    %v321 = vsub.f32 1.0, %v301
    %v322 = vsub.f32 1.0, %v303
    %v323 = vsub.f32 1.0, %v305
    %v324 = vsub.f32 1.0, %v307
    %v325 = vsub.f32 1.0, %v309
    %v326 = vsub.f32 1.0, %v311
    %v327 = vsub.f32 1.0, %v313
    %v328 = vsub.f32 1.0, %v315
    %v329 = vmax.f32 %v316, 0.0
    %v330 = vmax.f32 %v317, 0.0
    %v331 = vmax.f32 %v318, 0.0
    %v332 = vmax.f32 %v319, 0.0
    %v333 = vmax.f32 %v320, 0.0
    %v334 = vmax.f32 %v321, 0.0
    %v335 = vmax.f32 %v322, 0.0
    %v336 = vmax.f32 %v323, 0.0
    %v337 = vmax.f32 %v324, 0.0
    %v338 = vmax.f32 %v325, 0.0
    %v339 = vmax.f32 %v326, 0.0
    %v340 = vmax.f32 %v327, 0.0
    %v341 = vmax.f32 %v328, 0.0
    %v342 = vmul.f32 %v329, %v329
    %v343 = vmul.f32 %v330, %v330
    %v344 = vmul.f32 %v331, %v331
    %v345 = vmul.f32 %v332, %v332
    %v346 = vmul.f32 %v333, %v333
    %v347 = vmul.f32 %v334, %v334
    %v348 = vmul.f32 %v335, %v335
    %v349 = vmul.f32 %v336, %v336
    %v350 = vmul.f32 %v337, %v337
    %v351 = vmul.f32 %v338, %v338
    %v352 = vmul.f32 %v339, %v339
    %v353 = vmul.f32 %v340, %v340
    %v354 = vmul.f32 %v341, %v341
    %v355 = vsub.f32 0.0, %v54
    %v356 = vsub.f32 0.0, %v55
    %v357 = vsub.f32 0.0, %v56
    %v358 = vsub.f32 0.0, %v57
    %v359 = vsub.f32 0.0, %v58
    %v360 = vsub.f32 0.0, %v59
    %v361 = vsub.f32 0.0, %v60
    %v362 = vsub.f32 0.0, %v61
    %v363 = vsub.f32 0.0, %v62
    %v364 = vsub.f32 0.0, %v63
    %v365 = vsub.f32 0.0, %v64
    %v366 = vsub.f32 0.0, %v65
    %v367 = vsub.f32 0.0, %v66
    %v368 = vmul.f32 %v355, %v342
    %v369 = vmul.f32 %v356, %v343
    %v370 = vmul.f32 %v357, %v344
    %v371 = vmul.f32 %v358, %v345
    %v372 = vmul.f32 %v359, %v346
    %v373 = vmul.f32 %v360, %v347
    %v374 = vmul.f32 %v361, %v348
    %v375 = vmul.f32 %v362, %v349
    %v376 = vmul.f32 %v363, %v350
    %v377 = vmul.f32 %v364, %v351
    %v378 = vmul.f32 %v365, %v352
    %v379 = vmul.f32 %v366, %v353
    %v380 = vmul.f32 %v367, %v354
    %v381 = vmul.f32 %v368, %v277
    %v382 = vmul.f32 %v369, %v278
    %v383 = vmul.f32 %v370, %v279
    %v384 = vmul.f32 %v371, %v280
    %v385 = vmul.f32 %v372, %v281
    %v386 = vmul.f32 %v373, %v282
    %v387 = vmul.f32 %v374, %v283
    %v388 = vmul.f32 %v375, %v284
    %v389 = vmul.f32 %v376, %v285
    %v390 = vmul.f32 %v377, %v286
    %v391 = vmul.f32 %v378, %v287
    %v392 = vmul.f32 %v379, %v288
    %v393 = vmul.f32 %v380, %v289
    %v394 = vlaneseq
    %v395 = vshrl.u32 %v394, 7
    %v396 = vadd.s32 %v395, 8
    %v397 = vadd.s32 %v395, 16
    %v398 = vadd.s32 %v395, 24
    %v399 = vadd.s32 %v395, 32
    %v400 = vadd.s32 %v395, 40
    %v401 = vadd.s32 %v395, 48
    %v402 = vadd.s32 %v395, 56
    %v403 = vadd.s32 %v395, 64
    %v404 = vadd.s32 %v395, 72
    %v405 = vadd.s32 %v395, 80
    %v406 = vadd.s32 %v395, 88
    %v407 = vadd.s32 %v395, 96
    %s408 = smul.u32 0, 104
    %v409 = vstv %s408
    %v410 = vadd.s32 %v409, %v395
    %v411 = vadd.s32 %v409, %v396
    %v412 = vadd.s32 %v409, %v397
    %v413 = vadd.s32 %v409, %v398
    %v414 = vadd.s32 %v409, %v399
    %v415 = vadd.s32 %v409, %v400
    %v416 = vadd.s32 %v409, %v401
    %v417 = vadd.s32 %v409, %v402
    %v418 = vadd.s32 %v409, %v403
    %v419 = vadd.s32 %v409, %v404
    %v420 = vadd.s32 %v409, %v405
    %v421 = vadd.s32 %v409, %v406
    %v422 = vadd.s32 %v409, %v407
    %vm423 = vcmp.lt.s32.totalorder %v410, 100
    %vm424 = vcmp.lt.s32.totalorder %v411, 100
    %vm425 = vcmp.lt.s32.totalorder %v412, 100
    %vm426 = vcmp.lt.s32.totalorder %v413, 100
    %vm427 = vcmp.lt.s32.totalorder %v414, 100
    %vm428 = vcmp.lt.s32.totalorder %v415, 100
    %vm429 = vcmp.lt.s32.totalorder %v416, 100
    %vm430 = vcmp.lt.s32.totalorder %v417, 100
    %vm431 = vcmp.lt.s32.totalorder %v418, 100
    %vm432 = vcmp.lt.s32.totalorder %v419, 100
    %vm433 = vcmp.lt.s32.totalorder %v420, 100
    %vm434 = vcmp.lt.s32.totalorder %v421, 100
    %vm435 = vcmp.lt.s32.totalorder %v422, 100
    %v436 = vsel %vm423, %v381, 0.0
    %v437 = vsel %vm424, %v382, 0.0
    %v438 = vsel %vm425, %v383, 0.0
    %v439 = vsel %vm426, %v384, 0.0
    %v440 = vsel %vm427, %v385, 0.0
    %v441 = vsel %vm428, %v386, 0.0
    %v442 = vsel %vm429, %v387, 0.0
    %v443 = vsel %vm430, %v388, 0.0
    %v444 = vsel %vm431, %v389, 0.0
    %v445 = vsel %vm432, %v390, 0.0
    %v446 = vsel %vm433, %v391, 0.0
    %v447 = vsel %vm434, %v392, 0.0
    %v448 = vsel %vm435, %v393, 0.0
    %vm449 = vcmask 7168
    %v450 = vsel %vm449, %v436, 0.0
    %v451 = vsel %vm449, %v437, 0.0
    %v452 = vadd.f32 %v450, %v451
    %v453 = vsel %vm449, %v438, 0.0
    %v454 = vadd.f32 %v452, %v453
    %v455 = vsel %vm449, %v439, 0.0
    %v456 = vadd.f32 %v454, %v455
    %v457 = vsel %vm449, %v440, 0.0
    %v458 = vadd.f32 %v456, %v457
    %v459 = vsel %vm449, %v441, 0.0
    %v460 = vadd.f32 %v458, %v459
    %v461 = vsel %vm449, %v442, 0.0
    %v462 = vadd.f32 %v460, %v461
    %v463 = vsel %vm449, %v443, 0.0
    %v464 = vadd.f32 %v462, %v463
    %v465 = vsel %vm449, %v444, 0.0
    %v466 = vadd.f32 %v464, %v465
    %v467 = vsel %vm449, %v445, 0.0
    %v468 = vadd.f32 %v466, %v467
    %v469 = vsel %vm449, %v446, 0.0
    %v470 = vadd.f32 %v468, %v469
    %v471 = vsel %vm449, %v447, 0.0
    %v472 = vadd.f32 %v470, %v471
    %v473 = vsel %vm449, %v448, 0.0
    %v474 = vadd.f32 %v472, %v473
    %475 = vadd.xlane.f32.xlu0 %v474
    %v476 = vpop.xlane.xlu0 %475
    %v477 = vrot.slane %v476, 4
    %v478 = vadd.f32 %v476, %v477
    %v479 = vrot.slane %v478, 2
    %v480 = vadd.f32 %v478, %v479
    %v481 = vrot.slane %v480, 1
    %v482 = vadd.f32 %v480, %v481
    %s483 = vtos %v482
    %v484 = vstv %s483
    %485 = vst [vmem:[#allocation2] sm:$0xff] %v484
    // Predicated region
    $region14: #{tpu_custom_call.1} parent=1 // pred_check
      _
    $region15: #{tpu_custom_call.1} parent=1 // pred_check_branch
      %487 = sbr.rel (0) target = $region17
    $region16: #{tpu_custom_call.1} parent=1 // pred_region
      %s489 = ssub.s32 128, 128
      %490 = vsyncadd [#allocation3], %s489
      %s492 = sshll.u32 [#allocation2], 4
      %s493 = int_to_ptr.vmem [resolvable:$true] %s492
      %495 = dma.vmem_to_hbm [thread:$0]  %s493, 128, %s3, [#allocation3]
    $region17: #{tpu_custom_call.1} parent=1 // pred_fallthru
      _
    // Predicated region
    $region18: #{tpu_custom_call.1} parent=1 // pred_check
      _
    $region19: #{tpu_custom_call.1} parent=1 // pred_check_branch
      %497 = sbr.rel (0) target = $region21
    $region20: #{tpu_custom_call.1} parent=1 // pred_region
      %498 = dma.done [#allocation3], 128
    $region21: #{tpu_custom_call.1} parent=1 // pred_fallthru
      _
    %499 = vsyncpa [#allocation3], 1

</llo_original>
